<compile_context>
chip_gen: v5e
topology: v5e:2x2
jax: 0.10.0
libtpu: 0.0.40
codegen_flags: <defaults>
</compile_context>

<pallas_src>
import jax
import jax.numpy as jnp
from jax.experimental import pallas as pl
from jax.experimental.pallas import tpu as pltpu


def mlp_kernel(x_ref,
               w1_ref, b1_ref,
               w2_ref, b2_ref,
               w3_ref, b3_ref,
               w4_ref, b4_ref,
               o_ref):
    """One batch tile of the 4-layer MLP, feature-major: activations are (features, TM)."""
    x = x_ref[...]                                                  # (1, TM) f32

    # Layer 1: Linear(1 -> 64). K=1 contraction == broadcast multiply (VPU).
    # x broadcasts along sublanes (cheap, stride-0); w1 (64,1) lane-broadcast is
    # only ~8 vregs. Elementwise math in f32 (v5e-safe); store bf16 for the MXU.
    h1 = jnp.maximum(w1_ref[...] * x + b1_ref[...], 0.0)           # (64, TM) f32
    h1 = h1.astype(jnp.bfloat16)

    # Layer 2: Linear(64 -> 128). MXU matmul, bf16 operands, f32 accumulate.
    h2 = jnp.dot(w2_ref[...], h1,
                 preferred_element_type=jnp.float32) + b2_ref[...]
    h2 = jnp.maximum(h2, 0.0).astype(jnp.bfloat16)                  # (128, TM)

    # Layer 3: Linear(128 -> 64). MXU matmul.
    h3 = jnp.dot(w3_ref[...], h2,
                 preferred_element_type=jnp.float32) + b3_ref[...]
    h3 = jnp.maximum(h3, 0.0).astype(jnp.bfloat16)                  # (64, TM)

    # Layer 4: Linear(64 -> 1). Dense (1,64)@(64,TM) MXU matmul -> lane-dense
    # (1, TM) output row (no cross-lane XLU reduce, no masked partial stores).
    out = jnp.dot(w4_ref[...], h3,
                  preferred_element_type=jnp.float32) + b4_ref[...]
    o_ref[...] = out.astype(o_ref.dtype)                            # (1, TM)


def _round_up(n, m):
    return ((n + m - 1) // m) * m


def net_forward(x, params, *, tm_max=2048):
    """x: (B, 1) float32. params: dict of f32 weights (in,out) and biases (1,out). Returns (B, 1)."""
    B = x.shape[0]

    # Feature-major operands: batch on lanes, features on sublanes.
    x_fm = x.reshape(1, B)                                   # (1, B)    f32
    w1 = params["w1"].T                                      # (64, 1)   f32
    b1 = params["b1"].T                                      # (64, 1)   f32
    w2 = params["w2"].T.astype(jnp.bfloat16)                 # (128, 64) bf16 MXU operand
    b2 = params["b2"].T                                      # (128, 1)  f32
    w3 = params["w3"].T.astype(jnp.bfloat16)                 # (64, 128) bf16
    b3 = params["b3"].T                                      # (64, 1)   f32
    w4 = params["w4"].T.astype(jnp.bfloat16)                 # (1, 64)   bf16
    b4 = params["b4"]                                        # (1, 1)    f32

    # Batch-tile size: lane axis, so it must be a multiple of 128 (or the full
    # array). Prefer >= 2 grid blocks so the "parallel" axis can shard across
    # v7x's two TensorCores; cap at tm_max (tiles stay tiny in this layout).
    if B <= 128:
        tm = B
    else:
        tm = min(tm_max, _round_up((B + 1) // 2, 128))
    num_blocks = pl.cdiv(B, tm)        # ragged last block: OOB lanes masked on write

    def resident(arr):
        return pl.BlockSpec(arr.shape, lambda i: (0, 0))

    flops = 2 * B * (1 * 64 + 64 * 128 + 128 * 64 + 64 * 1)
    bytes_accessed = (sum(int(a.size) * a.dtype.itemsize
                          for a in (x_fm, w1, b1, w2, b2, w3, b3, w4, b4))
                      + B * 4)

    out_fm = pl.pallas_call(
        mlp_kernel,
        out_shape=jax.ShapeDtypeStruct((1, B), jnp.float32),
        grid=(num_blocks,),
        in_specs=[
            pl.BlockSpec((1, tm), lambda i: (0, i)),         # x: lane-dense batch tiles
            resident(w1), resident(b1),
            resident(w2), resident(b2),
            resident(w3), resident(b3),
            resident(w4), resident(b4),
        ],
        out_specs=pl.BlockSpec((1, tm), lambda i: (0, i)),
        compiler_params=pltpu.CompilerParams(
            dimension_semantics=("parallel",)),               # shards blocks across v7x's 2 TCs
        cost_estimate=pl.CostEstimate(flops=flops, transcendentals=0,
                                      bytes_accessed=bytes_accessed),
    )(x_fm, w1, b1, w2, b2, w3, b3, w4, b4)

    return out_fm.reshape(B, 1)


def init_params(key):
    """Deterministic init mimicking torch.nn.Linear's U(-1/sqrt(fan_in), 1/sqrt(fan_in))."""
    dims = [(1, 64), (64, 128), (128, 64), (64, 1)]
    params = {}
    keys = jax.random.split(key, 2 * len(dims))
    for i, (fin, fout) in enumerate(dims):
        bound = 1.0 / jnp.sqrt(float(fin))
        w = jax.random.uniform(keys[2 * i], (fin, fout), jnp.float32, -bound, bound)
        b = jax.random.uniform(keys[2 * i + 1], (1, fout), jnp.float32, -bound, bound)
        params[f"w{i + 1}"] = w
        params[f"b{i + 1}"] = b
    return params


def _ref_mixed(x, p):
    """Reference with the same f32 layer-1 math and bf16 casts as the kernel."""
    h = jnp.maximum(x * p["w1"].reshape(1, -1) + p["b1"], 0.0).astype(jnp.bfloat16)
    h = jnp.maximum(jnp.dot(h, p["w2"].astype(jnp.bfloat16),
                            preferred_element_type=jnp.float32) + p["b2"],
                    0.0).astype(jnp.bfloat16)
    h = jnp.maximum(jnp.dot(h, p["w3"].astype(jnp.bfloat16),
                            preferred_element_type=jnp.float32) + p["b3"],
                    0.0).astype(jnp.bfloat16)
    return jnp.dot(h, p["w4"].astype(jnp.bfloat16),
                   preferred_element_type=jnp.float32) + p["b4"]


def _ref_f32(x, p):
    """Full-f32 reference matching the original torch module's math."""
    h = jnp.maximum(x @ p["w1"] + p["b1"], 0.0)
    h = jnp.maximum(h @ p["w2"] + p["b2"], 0.0)
    h = jnp.maximum(h @ p["w3"] + p["b3"], 0.0)
    return h @ p["w4"] + p["b4"]


if __name__ == "__main__":
    key = jax.random.PRNGKey(0)
    pkey, xkey, xkey2 = jax.random.split(key, 3)

    params = init_params(pkey)

    # Small batch: single full-array block.
    B = 8
    x = jax.random.normal(xkey, (B, 1), dtype=jnp.float32)
    out = net_forward(x, params)
    jax.block_until_ready(out)
    assert out.shape == (B, 1)
    assert jnp.allclose(out, _ref_mixed(x, params), atol=5e-3, rtol=5e-3)
    assert jnp.allclose(out, _ref_f32(x, params), atol=5e-2, rtol=5e-2)

    # Larger batch: exercises the multi-block parallel grid + ragged last tile.
    B2 = 300
    x2 = jax.random.normal(xkey2, (B2, 1), dtype=jnp.float32)
    out2 = net_forward(x2, params)
    jax.block_until_ready(out2)
    assert out2.shape == (B2, 1)
    assert jnp.allclose(out2, _ref_mixed(x2, params), atol=5e-3, rtol=5e-3)
    assert jnp.allclose(out2, _ref_f32(x2, params), atol=5e-2, rtol=5e-2)

    print("KERNEL_OK")
</pallas_src>

<mosaic_0001>
module attributes {stable_mosaic.version = 11 : i64} {
  func.func @mlp_kernel(%arg0: i32, %arg1: memref<1x8xf32, #tpu.memory_space<vmem>>, %arg2: memref<64x1xf32, #tpu.memory_space<vmem>>, %arg3: memref<64x1xf32, #tpu.memory_space<vmem>>, %arg4: memref<128x64xbf16, #tpu.memory_space<vmem>>, %arg5: memref<128x1xf32, #tpu.memory_space<vmem>>, %arg6: memref<64x128xbf16, #tpu.memory_space<vmem>>, %arg7: memref<64x1xf32, #tpu.memory_space<vmem>>, %arg8: memref<1x64xbf16, #tpu.memory_space<vmem>>, %arg9: memref<1x1xf32, #tpu.memory_space<vmem>>, %arg10: memref<1x8xf32, #tpu.memory_space<vmem>>) attributes {dimension_semantics = [#tpu.dimension_semantics<parallel>], iteration_bounds = array<i64: 1>, scalar_prefetch = 0 : i64, scratch_operands = 0 : i64, tpu.core_type = #tpu.core_type<tc>, window_params = [{transform_indices = @transform_0, window_bounds = array<i64: 1, 8>}, {pipeline_mode = #tpu.pipeline_mode<synchronous>, transform_indices = @transform_1, window_bounds = array<i64: 64, 1>}, {pipeline_mode = #tpu.pipeline_mode<synchronous>, transform_indices = @transform_2, window_bounds = array<i64: 64, 1>}, {pipeline_mode = #tpu.pipeline_mode<synchronous>, transform_indices = @transform_3, window_bounds = array<i64: 128, 64>}, {pipeline_mode = #tpu.pipeline_mode<synchronous>, transform_indices = @transform_4, window_bounds = array<i64: 128, 1>}, {pipeline_mode = #tpu.pipeline_mode<synchronous>, transform_indices = @transform_5, window_bounds = array<i64: 64, 128>}, {pipeline_mode = #tpu.pipeline_mode<synchronous>, transform_indices = @transform_6, window_bounds = array<i64: 64, 1>}, {pipeline_mode = #tpu.pipeline_mode<synchronous>, transform_indices = @transform_7, window_bounds = array<i64: 1, 64>}, {pipeline_mode = #tpu.pipeline_mode<synchronous>, transform_indices = @transform_8, window_bounds = array<i64: 1, 1>}, {transform_indices = @transform_9, window_bounds = array<i64: 1, 8>}]} {
    %c0 = arith.constant 0 : index
    %c0_0 = arith.constant 0 : index
    %0 = vector.load %arg1[%c0, %c0_0] : memref<1x8xf32, #tpu.memory_space<vmem>>, vector<1x8xf32>
    %c0_1 = arith.constant 0 : index
    %c0_2 = arith.constant 0 : index
    %1 = vector.load %arg2[%c0_1, %c0_2] : memref<64x1xf32, #tpu.memory_space<vmem>>, vector<64x1xf32>
    %2 = vector.broadcast %1 : vector<64x1xf32> to vector<64x8xf32>
    %3 = vector.broadcast %0 : vector<1x8xf32> to vector<64x8xf32>
    %4 = arith.mulf %2, %3 : vector<64x8xf32>
    %c0_3 = arith.constant 0 : index
    %c0_4 = arith.constant 0 : index
    %5 = vector.load %arg3[%c0_3, %c0_4] : memref<64x1xf32, #tpu.memory_space<vmem>>, vector<64x1xf32>
    %6 = vector.broadcast %5 : vector<64x1xf32> to vector<64x8xf32>
    %7 = arith.addf %4, %6 : vector<64x8xf32>
    %cst = arith.constant 0.000000e+00 : f32
    %8 = vector.broadcast %cst : f32 to vector<64x8xf32>
    %9 = arith.maximumf %7, %8 : vector<64x8xf32>
    %10 = arith.truncf %9 : vector<64x8xf32> to vector<64x8xbf16>
    %c0_5 = arith.constant 0 : index
    %c0_6 = arith.constant 0 : index
    %11 = vector.load %arg4[%c0_5, %c0_6] : memref<128x64xbf16, #tpu.memory_space<vmem>>, vector<128x64xbf16>
    %cst_7 = arith.constant dense<0.000000e+00> : vector<128x8xf32>
    %12 = tpu.matmul %11, %10, %cst_7 {dimension_numbers = #tpu.dot_dimension_numbers<[1], [0], [0], [1], [0, 0, 1, 1], [], []>} : vector<128x64xbf16>, vector<64x8xbf16>, vector<128x8xf32> -> vector<128x8xf32>
    %c0_8 = arith.constant 0 : index
    %c0_9 = arith.constant 0 : index
    %13 = vector.load %arg5[%c0_8, %c0_9] : memref<128x1xf32, #tpu.memory_space<vmem>>, vector<128x1xf32>
    %14 = vector.broadcast %13 : vector<128x1xf32> to vector<128x8xf32>
    %15 = arith.addf %12, %14 : vector<128x8xf32>
    %cst_10 = arith.constant 0.000000e+00 : f32
    %16 = vector.broadcast %cst_10 : f32 to vector<128x8xf32>
    %17 = arith.maximumf %15, %16 : vector<128x8xf32>
    %18 = arith.truncf %17 : vector<128x8xf32> to vector<128x8xbf16>
    %c0_11 = arith.constant 0 : index
    %c0_12 = arith.constant 0 : index
    %19 = vector.load %arg6[%c0_11, %c0_12] : memref<64x128xbf16, #tpu.memory_space<vmem>>, vector<64x128xbf16>
    %cst_13 = arith.constant dense<0.000000e+00> : vector<64x8xf32>
    %20 = tpu.matmul %19, %18, %cst_13 {dimension_numbers = #tpu.dot_dimension_numbers<[1], [0], [0], [1], [0, 0, 1, 1], [], []>} : vector<64x128xbf16>, vector<128x8xbf16>, vector<64x8xf32> -> vector<64x8xf32>
    %c0_14 = arith.constant 0 : index
    %c0_15 = arith.constant 0 : index
    %21 = vector.load %arg7[%c0_14, %c0_15] : memref<64x1xf32, #tpu.memory_space<vmem>>, vector<64x1xf32>
    %22 = vector.broadcast %21 : vector<64x1xf32> to vector<64x8xf32>
    %23 = arith.addf %20, %22 : vector<64x8xf32>
    %cst_16 = arith.constant 0.000000e+00 : f32
    %24 = vector.broadcast %cst_16 : f32 to vector<64x8xf32>
    %25 = arith.maximumf %23, %24 : vector<64x8xf32>
    %26 = arith.truncf %25 : vector<64x8xf32> to vector<64x8xbf16>
    %c0_17 = arith.constant 0 : index
    %c0_18 = arith.constant 0 : index
    %27 = vector.load %arg8[%c0_17, %c0_18] : memref<1x64xbf16, #tpu.memory_space<vmem>>, vector<1x64xbf16>
    %cst_19 = arith.constant dense<0.000000e+00> : vector<1x8xf32>
    %28 = tpu.matmul %27, %26, %cst_19 {dimension_numbers = #tpu.dot_dimension_numbers<[1], [0], [0], [1], [0, 0, 1, 1], [], []>} : vector<1x64xbf16>, vector<64x8xbf16>, vector<1x8xf32> -> vector<1x8xf32>
    %c0_20 = arith.constant 0 : index
    %c0_21 = arith.constant 0 : index
    %29 = vector.load %arg9[%c0_20, %c0_21] : memref<1x1xf32, #tpu.memory_space<vmem>>, vector<1x1xf32>
    %30 = vector.broadcast %29 : vector<1x1xf32> to vector<1x8xf32>
    %31 = arith.addf %28, %30 : vector<1x8xf32>
    %c0_22 = arith.constant 0 : index
    %c0_23 = arith.constant 0 : index
    %32 = vector.load %arg10[%c0_22, %c0_23] : memref<1x8xf32, #tpu.memory_space<vmem>>, vector<1x8xf32>
    tpu.vector_store %arg10[%c0_22, %c0_23], %31 {strides = array<i32>} : memref<1x8xf32, #tpu.memory_space<vmem>>, vector<1x8xf32>,
    return
  }
  func.func @transform_0(%arg0: i32) -> (i32, i32) {
    %c0_i32 = arith.constant 0 : i32
    %c0_i32_0 = arith.constant 0 : i32
    return %c0_i32, %arg0 : i32, i32
  }
  func.func @transform_1(%arg0: i32) -> (i32, i32) {
    %c0_i32 = arith.constant 0 : i32
    %c0_i32_0 = arith.constant 0 : i32
    %c0_i32_1 = arith.constant 0 : i32
    return %c0_i32, %c0_i32_0 : i32, i32
  }
  func.func @transform_2(%arg0: i32) -> (i32, i32) {
    %c0_i32 = arith.constant 0 : i32
    %c0_i32_0 = arith.constant 0 : i32
    %c0_i32_1 = arith.constant 0 : i32
    return %c0_i32, %c0_i32_0 : i32, i32
  }
  func.func @transform_3(%arg0: i32) -> (i32, i32) {
    %c0_i32 = arith.constant 0 : i32
    %c0_i32_0 = arith.constant 0 : i32
    %c0_i32_1 = arith.constant 0 : i32
    return %c0_i32, %c0_i32_0 : i32, i32
  }
  func.func @transform_4(%arg0: i32) -> (i32, i32) {
    %c0_i32 = arith.constant 0 : i32
    %c0_i32_0 = arith.constant 0 : i32
    %c0_i32_1 = arith.constant 0 : i32
    return %c0_i32, %c0_i32_0 : i32, i32
  }
  func.func @transform_5(%arg0: i32) -> (i32, i32) {
    %c0_i32 = arith.constant 0 : i32
    %c0_i32_0 = arith.constant 0 : i32
    %c0_i32_1 = arith.constant 0 : i32
    return %c0_i32, %c0_i32_0 : i32, i32
  }
  func.func @transform_6(%arg0: i32) -> (i32, i32) {
    %c0_i32 = arith.constant 0 : i32
    %c0_i32_0 = arith.constant 0 : i32
    %c0_i32_1 = arith.constant 0 : i32
    return %c0_i32, %c0_i32_0 : i32, i32
  }
  func.func @transform_7(%arg0: i32) -> (i32, i32) {
    %c0_i32 = arith.constant 0 : i32
    %c0_i32_0 = arith.constant 0 : i32
    %c0_i32_1 = arith.constant 0 : i32
    return %c0_i32, %c0_i32_0 : i32, i32
  }
  func.func @transform_8(%arg0: i32) -> (i32, i32) {
    %c0_i32 = arith.constant 0 : i32
    %c0_i32_0 = arith.constant 0 : i32
    %c0_i32_1 = arith.constant 0 : i32
    return %c0_i32, %c0_i32_0 : i32, i32
  }
  func.func @transform_9(%arg0: i32) -> (i32, i32) {
    %c0_i32 = arith.constant 0 : i32
    %c0_i32_0 = arith.constant 0 : i32
    return %c0_i32, %arg0 : i32, i32
  }
}

</mosaic_0001>

<llo_original>
// kernel: tpu_custom_call.1
$region0: #{tpu_custom_call.1}
  #allocation0 [shape = 'u32[]', space=smem, size = 0x4, offset = 0x4, fixed_abs, tag = 'smem constant byte address 0x4 - core index']
  #allocation1 [shape = 'u32[72,128]{1,0:T(1,128)}', space=vmem, size = 0x9000, scoped, tag = 'internal scratch']
  #allocation2 [shape = 'f32[1,1]{1,0:T(1,128)S(1)}', space=vmem, size = 0x200, scoped, tag = 'scoped memory for tpu_custom_call.1']
  %s0 = inlined_call_operand.vmem [shape: f32[1,8], index: 0, kind: input, shape index: {}]
  %s1 = inlined_call_operand.vmem [shape: f32[64,1], index: 1, kind: input, shape index: {}]
  %s2 = inlined_call_operand.vmem [shape: f32[64,1], index: 2, kind: input, shape index: {}]
  %s3 = inlined_call_operand.vmem [shape: bf16[128,64], index: 3, kind: input, shape index: {}]
  %s4 = inlined_call_operand.vmem [shape: f32[128,1], index: 4, kind: input, shape index: {}]
  %s5 = inlined_call_operand.vmem [shape: bf16[64,128], index: 5, kind: input, shape index: {}]
  %s6 = inlined_call_operand.vmem [shape: f32[64,1], index: 6, kind: input, shape index: {}]
  %s7 = inlined_call_operand.vmem [shape: bf16[1,64], index: 7, kind: input, shape index: {}]
  %s8 = inlined_call_operand.<no memory space> [shape: f32[1,1], index: 8, kind: input, shape index: {}]
  %s9 = inlined_call_operand.hbm [shape: f32[1,8], index: 9, kind: output, shape index: {}]
  %s10 = sld [smem:[#allocation0]]
  $region46: #{tpu_custom_call.1} parent=0
    _
  %s12 = ssub.s32 1, %s10
  %s13 = scalar_select 0, %s12, %s10
  %v14 = vstv %s8
  %15 = vst [vmem:[#allocation2] sm:$0x1] %v14
  $region1: #{tpu_custom_call.1} parent=0
    #allocation3 [shape = 'u8[512]{0}', space=vmem, size = 0x400, scoped, tag = 'output window, operand 0, single buffered']
    #allocation4 [shape = 's32[1]{0}', space=sflag, size = 0x4, scoped, tag = 'scoped memory for tpu_custom_call.1']
    %16 = vsyncpa [#allocation4], 0
    // Predicated region
    $region2: #{tpu_custom_call.1} parent=1 // pred_check
      _
    $region3: #{tpu_custom_call.1} parent=1 // pred_check_branch
      %18 = sbr.rel (0) target = $region5
    $region4: #{tpu_custom_call.1} parent=1 // pred_region
      _
    $region5: #{tpu_custom_call.1} parent=1 // pred_fallthru
      _
    // Predicated region
    $region6: #{tpu_custom_call.1} parent=1 // pred_check
      _
    $region7: #{tpu_custom_call.1} parent=1 // pred_check_branch
      %20 = sbr.rel (0) target = $region9
    $region8: #{tpu_custom_call.1} parent=1 // pred_region
      _
    $region9: #{tpu_custom_call.1} parent=1 // pred_fallthru
      _
    // Predicated region
    $region10: #{tpu_custom_call.1} parent=1 // pred_check
      _
    $region11: #{tpu_custom_call.1} parent=1 // pred_check_branch
      %22 = sbr.rel (0) target = $region13
    $region12: #{tpu_custom_call.1} parent=1 // pred_region
      _
    $region13: #{tpu_custom_call.1} parent=1 // pred_fallthru
      _
    // Predicated region
    $region14: #{tpu_custom_call.1} parent=1 // pred_check
      _
    $region15: #{tpu_custom_call.1} parent=1 // pred_check_branch
      %24 = sbr.rel (0) target = $region17
    $region16: #{tpu_custom_call.1} parent=1 // pred_region
      _
    $region17: #{tpu_custom_call.1} parent=1 // pred_fallthru
      _
    // Predicated region
    $region18: #{tpu_custom_call.1} parent=1 // pred_check
      _
    $region19: #{tpu_custom_call.1} parent=1 // pred_check_branch
      %26 = sbr.rel (0) target = $region21
    $region20: #{tpu_custom_call.1} parent=1 // pred_region
      _
    $region21: #{tpu_custom_call.1} parent=1 // pred_fallthru
      _
    // Predicated region
    $region22: #{tpu_custom_call.1} parent=1 // pred_check
      _
    $region23: #{tpu_custom_call.1} parent=1 // pred_check_branch
      %28 = sbr.rel (0) target = $region25
    $region24: #{tpu_custom_call.1} parent=1 // pred_region
      _
    $region25: #{tpu_custom_call.1} parent=1 // pred_fallthru
      _
    // Predicated region
    $region26: #{tpu_custom_call.1} parent=1 // pred_check
      _
    $region27: #{tpu_custom_call.1} parent=1 // pred_check_branch
      %30 = sbr.rel (0) target = $region29
    $region28: #{tpu_custom_call.1} parent=1 // pred_region
      _
    $region29: #{tpu_custom_call.1} parent=1 // pred_fallthru
      _
    // Predicated region
    $region30: #{tpu_custom_call.1} parent=1 // pred_check
      _
    $region31: #{tpu_custom_call.1} parent=1 // pred_check_branch
      %32 = sbr.rel (0) target = $region33
    $region32: #{tpu_custom_call.1} parent=1 // pred_region
      _
    $region33: #{tpu_custom_call.1} parent=1 // pred_fallthru
      _
    // Predicated region
    $region34: #{tpu_custom_call.1} parent=1 // pred_check
      _
    $region35: #{tpu_custom_call.1} parent=1 // pred_check_branch
      %34 = sbr.rel (0) target = $region37
    $region36: #{tpu_custom_call.1} parent=1 // pred_region
      _
    $region37: #{tpu_custom_call.1} parent=1 // pred_fallthru
      _
    %v36 = vld [vmem:[%s0] sm:$0x1]
    %v37 = vld [vmem:[%s1] sm:$0xff]
    %v38 = vld [vmem:[%s1 + $0x8] sm:$0xff]
    %v39 = vld [vmem:[%s1 + $0x10] sm:$0xff]
    %v40 = vld [vmem:[%s1 + $0x18] sm:$0xff]
    %v41 = vld [vmem:[%s1 + $0x20] sm:$0xff]
    %v42 = vld [vmem:[%s1 + $0x28] sm:$0xff]
    %v43 = vld [vmem:[%s1 + $0x30] sm:$0xff]
    %v44 = vld [vmem:[%s1 + $0x38] sm:$0xff]
    %46 = vset.pattern.permute.xlu0 0
    %47 = vperm.xlu0 %46, %v37
    %v48 = vpop.permute.xlu0 %47
    %51 = vset.pattern.permute.xlu0 0
    %52 = vperm.xlu0 %51, %v38
    %v53 = vpop.permute.xlu0 %52
    %56 = vset.pattern.permute.xlu0 0
    %57 = vperm.xlu0 %56, %v39
    %v58 = vpop.permute.xlu0 %57
    %61 = vset.pattern.permute.xlu0 0
    %62 = vperm.xlu0 %61, %v40
    %v63 = vpop.permute.xlu0 %62
    %66 = vset.pattern.permute.xlu0 0
    %67 = vperm.xlu0 %66, %v41
    %v68 = vpop.permute.xlu0 %67
    %71 = vset.pattern.permute.xlu0 0
    %72 = vperm.xlu0 %71, %v42
    %v73 = vpop.permute.xlu0 %72
    %76 = vset.pattern.permute.xlu0 0
    %77 = vperm.xlu0 %76, %v43
    %v78 = vpop.permute.xlu0 %77
    %81 = vset.pattern.permute.xlu0 0
    %82 = vperm.xlu0 %81, %v44
    %v83 = vpop.permute.xlu0 %82
    %v86 = vperm.slane %v36, 0
    %v88 = vmul.f32 %v48, %v86
    %v89 = vmul.f32 %v53, %v86
    %v90 = vmul.f32 %v58, %v86
    %v91 = vmul.f32 %v63, %v86
    %v92 = vmul.f32 %v68, %v86
    %v93 = vmul.f32 %v73, %v86
    %v94 = vmul.f32 %v78, %v86
    %v95 = vmul.f32 %v83, %v86
    %v96 = vld [vmem:[%s2] sm:$0xff]
    %v97 = vld [vmem:[%s2 + $0x8] sm:$0xff]
    %v98 = vld [vmem:[%s2 + $0x10] sm:$0xff]
    %v99 = vld [vmem:[%s2 + $0x18] sm:$0xff]
    %v100 = vld [vmem:[%s2 + $0x20] sm:$0xff]
    %v101 = vld [vmem:[%s2 + $0x28] sm:$0xff]
    %v102 = vld [vmem:[%s2 + $0x30] sm:$0xff]
    %v103 = vld [vmem:[%s2 + $0x38] sm:$0xff]
    %105 = vset.pattern.permute.xlu0 0
    %106 = vperm.xlu0 %105, %v96
    %v107 = vpop.permute.xlu0 %106
    %110 = vset.pattern.permute.xlu0 0
    %111 = vperm.xlu0 %110, %v97
    %v112 = vpop.permute.xlu0 %111
    %115 = vset.pattern.permute.xlu0 0
    %116 = vperm.xlu0 %115, %v98
    %v117 = vpop.permute.xlu0 %116
    %120 = vset.pattern.permute.xlu0 0
    %121 = vperm.xlu0 %120, %v99
    %v122 = vpop.permute.xlu0 %121
    %125 = vset.pattern.permute.xlu0 0
    %126 = vperm.xlu0 %125, %v100
    %v127 = vpop.permute.xlu0 %126
    %130 = vset.pattern.permute.xlu0 0
    %131 = vperm.xlu0 %130, %v101
    %v132 = vpop.permute.xlu0 %131
    %135 = vset.pattern.permute.xlu0 0
    %136 = vperm.xlu0 %135, %v102
    %v137 = vpop.permute.xlu0 %136
    %140 = vset.pattern.permute.xlu0 0
    %141 = vperm.xlu0 %140, %v103
    %v142 = vpop.permute.xlu0 %141
    %v144 = vadd.f32 %v88, %v107
    %v145 = vadd.f32 %v89, %v112
    %v146 = vadd.f32 %v90, %v117
    %v147 = vadd.f32 %v91, %v122
    %v148 = vadd.f32 %v92, %v127
    %v149 = vadd.f32 %v93, %v132
    %v150 = vadd.f32 %v94, %v137
    %v151 = vadd.f32 %v95, %v142
    %v152 = vmax.f32 %v144, 0.0
    %v153 = vmax.f32 %v145, 0.0
    %v154 = vmax.f32 %v146, 0.0
    %v155 = vmax.f32 %v147, 0.0
    %v156 = vmax.f32 %v148, 0.0
    %v157 = vmax.f32 %v149, 0.0
    %v158 = vmax.f32 %v150, 0.0
    %v159 = vmax.f32 %v151, 0.0
    %v160 = vpack.c.bf16 %v153, %v152
    %v161 = vpack.c.bf16 %v155, %v154
    %v162 = vpack.c.bf16 %v157, %v156
    %v163 = vpack.c.bf16 %v159, %v158
    %v164 = vld [vmem:[%s3] sm:$0xf]
    %v165 = vld [vmem:[%s3 + $0x4] sm:$0xf]
    %v166 = vld [vmem:[%s3 + $0x8] sm:$0xf]
    %v167 = vld [vmem:[%s3 + $0xc] sm:$0xf]
    %v168 = vld [vmem:[%s3 + $0x10] sm:$0xf]
    %v169 = vld [vmem:[%s3 + $0x14] sm:$0xf]
    %v170 = vld [vmem:[%s3 + $0x18] sm:$0xf]
    %v171 = vld [vmem:[%s3 + $0x1c] sm:$0xf]
    %v172 = vld [vmem:[%s3 + $0x20] sm:$0xf]
    %v173 = vld [vmem:[%s3 + $0x24] sm:$0xf]
    %v174 = vld [vmem:[%s3 + $0x28] sm:$0xf]
    %v175 = vld [vmem:[%s3 + $0x2c] sm:$0xf]
    %v176 = vld [vmem:[%s3 + $0x30] sm:$0xf]
    %v177 = vld [vmem:[%s3 + $0x34] sm:$0xf]
    %v178 = vld [vmem:[%s3 + $0x38] sm:$0xf]
    %v179 = vld [vmem:[%s3 + $0x3c] sm:$0xf]
    %v180 = vld [vmem:[%s4] sm:$0xff]
    %v181 = vld [vmem:[%s4 + $0x8] sm:$0xff]
    %v182 = vld [vmem:[%s4 + $0x10] sm:$0xff]
    %v183 = vld [vmem:[%s4 + $0x18] sm:$0xff]
    %v184 = vld [vmem:[%s4 + $0x20] sm:$0xff]
    %v185 = vld [vmem:[%s4 + $0x28] sm:$0xff]
    %v186 = vld [vmem:[%s4 + $0x30] sm:$0xff]
    %v187 = vld [vmem:[%s4 + $0x38] sm:$0xff]
    %v188 = vld [vmem:[%s4 + $0x40] sm:$0xff]
    %v189 = vld [vmem:[%s4 + $0x48] sm:$0xff]
    %v190 = vld [vmem:[%s4 + $0x50] sm:$0xff]
    %v191 = vld [vmem:[%s4 + $0x58] sm:$0xff]
    %v192 = vld [vmem:[%s4 + $0x60] sm:$0xff]
    %v193 = vld [vmem:[%s4 + $0x68] sm:$0xff]
    %v194 = vld [vmem:[%s4 + $0x70] sm:$0xff]
    %v195 = vld [vmem:[%s4 + $0x78] sm:$0xff]
    %197 = vset.pattern.permute.xlu0 0
    %198 = vperm.xlu0 %197, %v180
    %v199 = vpop.permute.xlu0 %198
    %202 = vset.pattern.permute.xlu0 0
    %203 = vperm.xlu0 %202, %v181
    %v204 = vpop.permute.xlu0 %203
    %207 = vset.pattern.permute.xlu0 0
    %208 = vperm.xlu0 %207, %v182
    %v209 = vpop.permute.xlu0 %208
    %212 = vset.pattern.permute.xlu0 0
    %213 = vperm.xlu0 %212, %v183
    %v214 = vpop.permute.xlu0 %213
    %217 = vset.pattern.permute.xlu0 0
    %218 = vperm.xlu0 %217, %v184
    %v219 = vpop.permute.xlu0 %218
    %222 = vset.pattern.permute.xlu0 0
    %223 = vperm.xlu0 %222, %v185
    %v224 = vpop.permute.xlu0 %223
    %227 = vset.pattern.permute.xlu0 0
    %228 = vperm.xlu0 %227, %v186
    %v229 = vpop.permute.xlu0 %228
    %232 = vset.pattern.permute.xlu0 0
    %233 = vperm.xlu0 %232, %v187
    %v234 = vpop.permute.xlu0 %233
    %237 = vset.pattern.permute.xlu0 0
    %238 = vperm.xlu0 %237, %v188
    %v239 = vpop.permute.xlu0 %238
    %242 = vset.pattern.permute.xlu0 0
    %243 = vperm.xlu0 %242, %v189
    %v244 = vpop.permute.xlu0 %243
    %247 = vset.pattern.permute.xlu0 0
    %248 = vperm.xlu0 %247, %v190
    %v249 = vpop.permute.xlu0 %248
    %252 = vset.pattern.permute.xlu0 0
    %253 = vperm.xlu0 %252, %v191
    %v254 = vpop.permute.xlu0 %253
    %257 = vset.pattern.permute.xlu0 0
    %258 = vperm.xlu0 %257, %v192
    %v259 = vpop.permute.xlu0 %258
    %262 = vset.pattern.permute.xlu0 0
    %263 = vperm.xlu0 %262, %v193
    %v264 = vpop.permute.xlu0 %263
    %267 = vset.pattern.permute.xlu0 0
    %268 = vperm.xlu0 %267, %v194
    %v269 = vpop.permute.xlu0 %268
    %272 = vset.pattern.permute.xlu0 0
    %273 = vperm.xlu0 %272, %v195
    %v274 = vpop.permute.xlu0 %273
    %v292 = vunpack.c.l.b16 %v164
    %v293 = vunpack.c.l.b16 %v165
    %v294 = vunpack.c.l.b16 %v166
    %v295 = vunpack.c.l.b16 %v167
    %v296 = vunpack.c.l.b16 %v168
    %v297 = vunpack.c.l.b16 %v169
    %v298 = vunpack.c.l.b16 %v170
    %v299 = vunpack.c.l.b16 %v171
    %v300 = vunpack.c.l.b16 %v172
    %v301 = vunpack.c.l.b16 %v173
    %v302 = vunpack.c.l.b16 %v174
    %v303 = vunpack.c.l.b16 %v175
    %v304 = vunpack.c.l.b16 %v176
    %v305 = vunpack.c.l.b16 %v177
    %v306 = vunpack.c.l.b16 %v178
    %v307 = vunpack.c.l.b16 %v179
    %v308 = vpack.c.b16 %v293, %v292
    %v309 = vpack.c.b16 %v295, %v294
    %v310 = vpack.c.b16 %v297, %v296
    %v311 = vpack.c.b16 %v299, %v298
    %v312 = vpack.c.b16 %v301, %v300
    %v313 = vpack.c.b16 %v303, %v302
    %v314 = vpack.c.b16 %v305, %v304
    %v315 = vpack.c.b16 %v307, %v306
    %vm316 = vcmask 523264
    %v318 = vsel %vm316, %v308, 0
    %v321 = vsel %vm316, %v309, 0
    %v324 = vsel %vm316, %v310, 0
    %v327 = vsel %vm316, %v311, 0
    %v330 = vsel %vm316, %v312, 0
    %v333 = vsel %vm316, %v313, 0
    %v336 = vsel %vm316, %v314, 0
    %v339 = vsel %vm316, %v315, 0
    %341 = vmatpush.bf16.msra.mxu0 0
    %342 = vmatpush.bf16.msra.mxu0 0
    %343 = vmatpush.bf16.msra.mxu0 0
    %344 = vmatpush.bf16.msra.mxu0 0
    %345 = vmatpush.bf16.msra.mxu0 %v163
    %346 = vmatpush.bf16.msra.mxu0 %v162
    %347 = vmatpush.bf16.msra.mxu0 %v161
    %348 = vmatpush.bf16.msra.mxu0 %v160
    %349 = vmatmul.bf16.gmra.mxu0 %v318
    %v350 = vpop.f32.mrf.mxu0
    %v351 = vadd.f32 %v199, %v350
    %v352 = vpop.f32.mrf.mxu0
    %v353 = vadd.f32 %v204, %v352
    %354 = vmatmul.bf16.gmra.mxu0 %v321
    %v355 = vpop.f32.mrf.mxu0
    %v356 = vadd.f32 %v209, %v355
    %v357 = vpop.f32.mrf.mxu0
    %v358 = vadd.f32 %v214, %v357
    %359 = vmatmul.bf16.gmra.mxu0 %v324
    %v360 = vpop.f32.mrf.mxu0
    %v361 = vadd.f32 %v219, %v360
    %v362 = vpop.f32.mrf.mxu0
    %v363 = vadd.f32 %v224, %v362
    %364 = vmatmul.bf16.gmra.mxu0 %v327
    %v365 = vpop.f32.mrf.mxu0
    %v366 = vadd.f32 %v229, %v365
    %v367 = vpop.f32.mrf.mxu0
    %v368 = vadd.f32 %v234, %v367
    %369 = vmatmul.bf16.gmra.mxu0 %v330
    %v370 = vpop.f32.mrf.mxu0
    %v371 = vadd.f32 %v239, %v370
    %v372 = vpop.f32.mrf.mxu0
    %v373 = vadd.f32 %v244, %v372
    %374 = vmatmul.bf16.gmra.mxu0 %v333
    %v375 = vpop.f32.mrf.mxu0
    %v376 = vadd.f32 %v249, %v375
    %v377 = vpop.f32.mrf.mxu0
    %v378 = vadd.f32 %v254, %v377
    %379 = vmatmul.bf16.gmra.mxu0 %v336
    %v380 = vpop.f32.mrf.mxu0
    %v381 = vadd.f32 %v259, %v380
    %v382 = vpop.f32.mrf.mxu0
    %v383 = vadd.f32 %v264, %v382
    %384 = vmatmul.bf16.gmra.mxu0 %v339
    %v385 = vpop.f32.mrf.mxu0
    %v386 = vadd.f32 %v269, %v385
    %v387 = vpop.f32.mrf.mxu0
    %v388 = vadd.f32 %v274, %v387
    %389 = vdwg.mxu0
    %v390 = vmax.f32 %v351, 0.0
    %v391 = vmax.f32 %v353, 0.0
    %v392 = vmax.f32 %v356, 0.0
    %v393 = vmax.f32 %v358, 0.0
    %v394 = vmax.f32 %v361, 0.0
    %v395 = vmax.f32 %v363, 0.0
    %v396 = vmax.f32 %v366, 0.0
    %v397 = vmax.f32 %v368, 0.0
    %v398 = vmax.f32 %v371, 0.0
    %v399 = vmax.f32 %v373, 0.0
    %v400 = vmax.f32 %v376, 0.0
    %v401 = vmax.f32 %v378, 0.0
    %v402 = vmax.f32 %v381, 0.0
    %v403 = vmax.f32 %v383, 0.0
    %v404 = vmax.f32 %v386, 0.0
    %v405 = vmax.f32 %v388, 0.0
    %v406 = vpack.c.bf16 %v391, %v390
    %v407 = vpack.c.bf16 %v393, %v392
    %v408 = vpack.c.bf16 %v395, %v394
    %v409 = vpack.c.bf16 %v397, %v396
    %v410 = vpack.c.bf16 %v399, %v398
    %v411 = vpack.c.bf16 %v401, %v400
    %v412 = vpack.c.bf16 %v403, %v402
    %v413 = vpack.c.bf16 %v405, %v404
    %v414 = vld [vmem:[%s5] sm:$0xf]
    %v415 = vld [vmem:[%s5 + $0x4] sm:$0xf]
    %v416 = vld [vmem:[%s5 + $0x8] sm:$0xf]
    %v417 = vld [vmem:[%s5 + $0xc] sm:$0xf]
    %v418 = vld [vmem:[%s5 + $0x10] sm:$0xf]
    %v419 = vld [vmem:[%s5 + $0x14] sm:$0xf]
    %v420 = vld [vmem:[%s5 + $0x18] sm:$0xf]
    %v421 = vld [vmem:[%s5 + $0x1c] sm:$0xf]
    %v422 = vld [vmem:[%s6] sm:$0xff]
    %v423 = vld [vmem:[%s6 + $0x8] sm:$0xff]
    %v424 = vld [vmem:[%s6 + $0x10] sm:$0xff]
    %v425 = vld [vmem:[%s6 + $0x18] sm:$0xff]
    %v426 = vld [vmem:[%s6 + $0x20] sm:$0xff]
    %v427 = vld [vmem:[%s6 + $0x28] sm:$0xff]
    %v428 = vld [vmem:[%s6 + $0x30] sm:$0xff]
    %v429 = vld [vmem:[%s6 + $0x38] sm:$0xff]
    %431 = vset.pattern.permute.xlu0 0
    %432 = vperm.xlu0 %431, %v422
    %v433 = vpop.permute.xlu0 %432
    %436 = vset.pattern.permute.xlu0 0
    %437 = vperm.xlu0 %436, %v423
    %v438 = vpop.permute.xlu0 %437
    %441 = vset.pattern.permute.xlu0 0
    %442 = vperm.xlu0 %441, %v424
    %v443 = vpop.permute.xlu0 %442
    %446 = vset.pattern.permute.xlu0 0
    %447 = vperm.xlu0 %446, %v425
    %v448 = vpop.permute.xlu0 %447
    %451 = vset.pattern.permute.xlu0 0
    %452 = vperm.xlu0 %451, %v426
    %v453 = vpop.permute.xlu0 %452
    %456 = vset.pattern.permute.xlu0 0
    %457 = vperm.xlu0 %456, %v427
    %v458 = vpop.permute.xlu0 %457
    %461 = vset.pattern.permute.xlu0 0
    %462 = vperm.xlu0 %461, %v428
    %v463 = vpop.permute.xlu0 %462
    %466 = vset.pattern.permute.xlu0 0
    %467 = vperm.xlu0 %466, %v429
    %v468 = vpop.permute.xlu0 %467
    %v478 = vunpack.c.l.b16 %v414
    %v479 = vunpack.c.l.b16 %v415
    %v480 = vunpack.c.l.b16 %v416
    %v481 = vunpack.c.l.b16 %v417
    %v482 = vunpack.c.l.b16 %v418
    %v483 = vunpack.c.l.b16 %v419
    %v484 = vunpack.c.l.b16 %v420
    %v485 = vunpack.c.l.b16 %v421
    %v486 = vpack.c.b16 %v479, %v478
    %v487 = vpack.c.b16 %v481, %v480
    %v488 = vpack.c.b16 %v483, %v482
    %v489 = vpack.c.b16 %v485, %v484
    %494 = vmatpush.bf16.msra.mxu0 %v413
    %495 = vmatpush.bf16.msra.mxu0 %v412
    %496 = vmatpush.bf16.msra.mxu0 %v411
    %497 = vmatpush.bf16.msra.mxu0 %v410
    %498 = vmatpush.bf16.msra.mxu0 %v409
    %499 = vmatpush.bf16.msra.mxu0 %v408
    %500 = vmatpush.bf16.msra.mxu0 %v407
    %501 = vmatpush.bf16.msra.mxu0 %v406
    %502 = vmatmul.bf16.gmra.mxu0 %v486
    %v503 = vpop.f32.mrf.mxu0
    %v504 = vadd.f32 %v433, %v503
    %v505 = vpop.f32.mrf.mxu0
    %v506 = vadd.f32 %v438, %v505
    %507 = vmatmul.bf16.gmra.mxu0 %v487
    %v508 = vpop.f32.mrf.mxu0
    %v509 = vadd.f32 %v443, %v508
    %v510 = vpop.f32.mrf.mxu0
    %v511 = vadd.f32 %v448, %v510
    %512 = vmatmul.bf16.gmra.mxu0 %v488
    %v513 = vpop.f32.mrf.mxu0
    %v514 = vadd.f32 %v453, %v513
    %v515 = vpop.f32.mrf.mxu0
    %v516 = vadd.f32 %v458, %v515
    %517 = vmatmul.bf16.gmra.mxu0 %v489
    %v518 = vpop.f32.mrf.mxu0
    %v519 = vadd.f32 %v463, %v518
    %v520 = vpop.f32.mrf.mxu0
    %v521 = vadd.f32 %v468, %v520
    %522 = vdwg.mxu0
    %v523 = vmax.f32 %v504, 0.0
    %v524 = vmax.f32 %v506, 0.0
    %v525 = vmax.f32 %v509, 0.0
    %v526 = vmax.f32 %v511, 0.0
    %v527 = vmax.f32 %v514, 0.0
    %v528 = vmax.f32 %v516, 0.0
    %v529 = vmax.f32 %v519, 0.0
    %v530 = vmax.f32 %v521, 0.0
    %v531 = vpack.c.bf16 %v524, %v523
    %v532 = vpack.c.bf16 %v526, %v525
    %v533 = vpack.c.bf16 %v528, %v527
    %v534 = vpack.c.bf16 %v530, %v529
    %v535 = vld [vmem:[%s7] sm:$0x1]
    %v536 = vld [vmem:[#allocation2] sm:$0x1]
    %538 = vset.pattern.permute.xlu0 0
    %539 = vperm.xlu0 %538, %v536
    %v540 = vpop.permute.xlu0 %539
    %v542 = vperm.slane %v540, 0
    %v544 = vsel %vm316, %v535, 0
    %546 = vmatpush.bf16.msra.mxu0 0
    %547 = vmatpush.bf16.msra.mxu0 0
    %548 = vmatpush.bf16.msra.mxu0 0
    %549 = vmatpush.bf16.msra.mxu0 0
    %550 = vmatpush.bf16.msra.mxu0 %v534
    %551 = vmatpush.bf16.msra.mxu0 %v533
    %552 = vmatpush.bf16.msra.mxu0 %v532
    %553 = vmatpush.bf16.msra.mxu0 %v531
    %554 = vmatmul.bf16.gmra.mxu0 %v544
    %v555 = vpop.f32.mrf.mxu0
    %v556 = vadd.f32 %v542, %v555
    %v557 = vpop.f32.mrf.mxu0
    %558 = vdwg.mxu0
    %vm559 = vcmask 57344
    %560 = vst.msk [vmem:[#allocation3] sm:$0x1] %vm559, %v556
    // Predicated region
    $region38: #{tpu_custom_call.1} parent=1 // pred_check
      _
    $region39: #{tpu_custom_call.1} parent=1 // pred_check_branch
      %562 = sbr.rel (0) target = $region41
    $region40: #{tpu_custom_call.1} parent=1 // pred_region
      %564 = vsyncadd [#allocation4], 0
      %s566 = sshll.u32 [#allocation3], 4
      %s567 = int_to_ptr.vmem [resolvable:$true] %s566
      %s568 = sshll.u32 %s9, 4
      %s569 = int_to_ptr.hbm [resolvable:$true] %s568
      %571 = dma.vmem_to_hbm [thread:$0]  %s567, 16, %s569, [#allocation4]
    $region41: #{tpu_custom_call.1} parent=1 // pred_fallthru
      _
    // Predicated region
    $region42: #{tpu_custom_call.1} parent=1 // pred_check
      _
    $region43: #{tpu_custom_call.1} parent=1 // pred_check_branch
      %573 = sbr.rel (0) target = $region45
    $region44: #{tpu_custom_call.1} parent=1 // pred_region
      %575 = dma.done [#allocation4], 16
    $region45: #{tpu_custom_call.1} parent=1 // pred_fallthru
      _
    %576 = vsyncpa [#allocation4], 1

</llo_original>
